<compile_context>
chip_gen: v5e
topology: v5e:2x2
jax: 0.10.0
libtpu: 0.0.40
codegen_flags: <defaults>
</compile_context>

<pallas_src>
import functools

import jax
import jax.numpy as jnp
from jax.experimental import pallas as pl
from jax.experimental.pallas import tpu as pltpu


LANE = 128
ROWS = 16          # batch-tile row alignment (safe for bf16 (16,128) packing)


def _round_up(x: int, m: int) -> int:
    return ((x + m - 1) // m) * m


def qnetwork_kernel(x_ref, w1_ref, b1_ref, w2_ref, b2_ref, w3_ref, b3_ref, out_ref):
    # x streamed in f32; cast to bf16 in VMEM (hides under DMA). MXU accumulates f32;
    # bias add + ReLU in f32.
    x = x_ref[...].astype(jnp.bfloat16)
    h1 = jnp.dot(x, w1_ref[...], preferred_element_type=jnp.float32) + b1_ref[...]
    h1 = jnp.maximum(h1, 0.0)
    h2 = jnp.dot(h1.astype(jnp.bfloat16), w2_ref[...],
                 preferred_element_type=jnp.float32) + b2_ref[...]
    h2 = jnp.maximum(h2, 0.0)
    q = jnp.dot(h2.astype(jnp.bfloat16), w3_ref[...],
                preferred_element_type=jnp.float32) + b3_ref[...]
    out_ref[...] = q.astype(out_ref.dtype)


def prepare_params(params):
    """One-time parameter prep (call once, reuse for every forward).

    Pads hidden/action dims to lane multiples (exact: padded rows/cols are zero) and
    casts weights to bf16. Weights are stored [in, out] (i.e. PyTorch W.T); biases may
    be (out,) or (1, out). Returns (padded_params, action_dim)."""
    w1 = jnp.asarray(params["w1"], jnp.float32)
    w2 = jnp.asarray(params["w2"], jnp.float32)
    w3 = jnp.asarray(params["w3"], jnp.float32)
    b1 = jnp.asarray(params["b1"], jnp.float32).reshape(1, -1)
    b2 = jnp.asarray(params["b2"], jnp.float32).reshape(1, -1)
    b3 = jnp.asarray(params["b3"], jnp.float32).reshape(1, -1)

    state_dim, hidden_dim = w1.shape
    action_dim = w3.shape[1]
    h_pad = _round_up(hidden_dim, LANE)
    a_pad = _round_up(action_dim, LANE)

    def pad2(a, rows, cols):
        return jnp.pad(a, ((0, rows - a.shape[0]), (0, cols - a.shape[1])))

    padded = {
        "w1": pad2(w1, state_dim, h_pad).astype(jnp.bfloat16),
        "b1": pad2(b1, 1, h_pad),                       # biases stay f32
        "w2": pad2(w2, h_pad, h_pad).astype(jnp.bfloat16),
        "b2": pad2(b2, 1, h_pad),
        "w3": pad2(w3, h_pad, a_pad).astype(jnp.bfloat16),
        "b3": pad2(b3, 1, a_pad),
    }
    return padded, int(action_dim)


@functools.partial(jax.jit, static_argnames=("action_dim", "tb"))
def qnetwork_forward(state, padded_params, *, action_dim, tb: int = 2048):
    """state: [B, state_dim] f32. padded_params: output of prepare_params()."""
    w1p, b1p = padded_params["w1"], padded_params["b1"]
    w2p, b2p = padded_params["w2"], padded_params["b2"]
    w3p, b3p = padded_params["w3"], padded_params["b3"]

    B, state_dim = state.shape
    h_pad = w1p.shape[1]
    a_pad = w3p.shape[1]

    # --- batch tiling: rows aligned to 16; >=2 (even) grid steps when B allows so the
    #     batch axis shards across both TensorCores on v7x ---------------------------
    n_rows = _round_up(B, ROWS)
    max_tb = _round_up(max(int(tb), ROWS), ROWS)
    steps = -(-n_rows // max_tb)
    if n_rows >= 2 * ROWS:
        steps = max(steps, 2)
        if steps % 2:
            steps += 1
    TB = _round_up(-(-n_rows // steps), ROWS)
    b_pad = TB * steps

    x = state
    if b_pad != B:
        x = jnp.pad(x, ((0, b_pad - B), (0, 0)))

    # Resident (fetched-once) weights/biases: constant index_map + single buffer.
    def resident(shape):
        return pl.BlockSpec(shape, lambda i: (0, 0),
                            pipeline_mode=pl.Buffered(buffer_count=1))

    # Advisory cost estimate (static ints) so XLA overlaps surrounding ops.
    param_bytes = sum(int(a.size) * a.dtype.itemsize
                      for a in (w1p, b1p, w2p, b2p, w3p, b3p))
    flops = 2 * b_pad * (state_dim * h_pad + h_pad * h_pad + h_pad * a_pad)
    bytes_accessed = b_pad * state_dim * 4 + b_pad * a_pad * 2 + param_bytes

    # VMEM budget: single-buffered params + double-buffered x/out tiles + headroom.
    stream_bytes = 2 * TB * state_dim * 4 + 2 * TB * a_pad * 2
    vmem_limit = int(min(max(32 << 20, param_bytes + stream_bytes + (4 << 20)), 96 << 20))

    out_padded = pl.pallas_call(
        qnetwork_kernel,
        out_shape=jax.ShapeDtypeStruct((b_pad, a_pad), jnp.bfloat16),
        grid=(b_pad // TB,),
        in_specs=[
            pl.BlockSpec((TB, state_dim), lambda i: (i, 0)),   # streamed, double-buffered
            resident(w1p.shape), resident(b1p.shape),
            resident(w2p.shape), resident(b2p.shape),
            resident(w3p.shape), resident(b3p.shape),
        ],
        out_specs=pl.BlockSpec((TB, a_pad), lambda i: (i, 0)),
        compiler_params=pltpu.CompilerParams(
            dimension_semantics=("parallel",),     # 2-TC sharding on v7x, no-op elsewhere
            vmem_limit_bytes=vmem_limit,
        ),
        cost_estimate=pl.CostEstimate(
            flops=flops, transcendentals=0, bytes_accessed=bytes_accessed),
    )(x, w1p, b1p, w2p, b2p, w3p, b3p)

    # Slice away batch/lane padding; restore the module's f32 output dtype.
    return out_padded[:B, :action_dim].astype(jnp.float32)


def init_params(key, state_dim, action_dim, hidden_dim):
    """Deterministic init mimicking nn.Linear's U(-1/sqrt(fan_in), 1/sqrt(fan_in)).
    Weights stored as [in, out] (transposed vs PyTorch)."""
    ks = jax.random.split(key, 6)

    def linear(kw, kb, fan_in, fan_out):
        bound = 1.0 / jnp.sqrt(fan_in)
        w = jax.random.uniform(kw, (fan_in, fan_out), jnp.float32, -bound, bound)
        b = jax.random.uniform(kb, (1, fan_out), jnp.float32, -bound, bound)
        return w, b

    w1, b1 = linear(ks[0], ks[1], state_dim, hidden_dim)
    w2, b2 = linear(ks[2], ks[3], hidden_dim, hidden_dim)
    w3, b3 = linear(ks[4], ks[5], hidden_dim, action_dim)
    return {"w1": w1, "b1": b1, "w2": w2, "b2": b2, "w3": w3, "b3": b3}


if __name__ == "__main__":
    key = jax.random.PRNGKey(0)
    k_params, k_state = jax.random.split(key)

    batch = 8
    state_dim = 16
    action_dim = 4
    hidden_dim = 32

    params = init_params(k_params, state_dim, action_dim, hidden_dim)
    state = jax.random.normal(k_state, (batch, state_dim), jnp.float32)

    # One-time param prep (padding + bf16 cast) — hoisted out of the forward.
    padded_params, a_dim = prepare_params(params)
    padded_params = jax.tree_util.tree_map(jax.block_until_ready, padded_params)

    q_values = qnetwork_forward(state, padded_params, action_dim=a_dim)
    jax.block_until_ready(q_values)
    assert q_values.shape == (batch, action_dim)

    # Reference 1: same bf16-input / f32-accumulate / bf16-output path (tight check).
    xb = state.astype(jnp.bfloat16)
    w1b = params["w1"].astype(jnp.bfloat16)
    w2b = params["w2"].astype(jnp.bfloat16)
    w3b = params["w3"].astype(jnp.bfloat16)
    h1 = jnp.maximum(jnp.dot(xb, w1b, preferred_element_type=jnp.float32) + params["b1"], 0.0)
    h2 = jnp.maximum(jnp.dot(h1.astype(jnp.bfloat16), w2b,
                             preferred_element_type=jnp.float32) + params["b2"], 0.0)
    q_bf = jnp.dot(h2.astype(jnp.bfloat16), w3b,
                   preferred_element_type=jnp.float32) + params["b3"]
    q_ref_bf16 = q_bf.astype(jnp.bfloat16).astype(jnp.float32)
    assert jnp.allclose(q_values, q_ref_bf16, atol=1e-2, rtol=1e-2), \
        f"max diff vs bf16 ref: {jnp.max(jnp.abs(q_values - q_ref_bf16))}"

    # Reference 2: full-f32 PyTorch-equivalent forward (loose semantic check).
    h1f = jnp.maximum(state @ params["w1"] + params["b1"], 0.0)
    h2f = jnp.maximum(h1f @ params["w2"] + params["b2"], 0.0)
    q_ref_f32 = h2f @ params["w3"] + params["b3"]
    assert jnp.allclose(q_values, q_ref_f32, atol=5e-2, rtol=5e-2), \
        f"max diff vs f32 ref: {jnp.max(jnp.abs(q_values - q_ref_f32))}"

    print("KERNEL_OK")
</pallas_src>

<mosaic_0001>
module attributes {stable_mosaic.version = 11 : i64} {
  func.func @qnetwork_kernel(%arg0: i32, %arg1: memref<16x16xf32, #tpu.memory_space<vmem>>, %arg2: memref<16x128xbf16, #tpu.memory_space<vmem>>, %arg3: memref<1x128xf32, #tpu.memory_space<vmem>>, %arg4: memref<128x128xbf16, #tpu.memory_space<vmem>>, %arg5: memref<1x128xf32, #tpu.memory_space<vmem>>, %arg6: memref<128x128xbf16, #tpu.memory_space<vmem>>, %arg7: memref<1x128xf32, #tpu.memory_space<vmem>>, %arg8: memref<16x128xbf16, #tpu.memory_space<vmem>>) attributes {dimension_semantics = [#tpu.dimension_semantics<parallel>], iteration_bounds = array<i64: 1>, scalar_prefetch = 0 : i64, scratch_operands = 0 : i64, tpu.core_type = #tpu.core_type<tc>, window_params = [{transform_indices = @transform_0, window_bounds = array<i64: 16, 16>}, {pipeline_mode = #tpu.pipeline_mode<synchronous>, transform_indices = @transform_1, window_bounds = array<i64: 16, 128>}, {pipeline_mode = #tpu.pipeline_mode<synchronous>, transform_indices = @transform_2, window_bounds = array<i64: 1, 128>}, {pipeline_mode = #tpu.pipeline_mode<synchronous>, transform_indices = @transform_3, window_bounds = array<i64: 128, 128>}, {pipeline_mode = #tpu.pipeline_mode<synchronous>, transform_indices = @transform_4, window_bounds = array<i64: 1, 128>}, {pipeline_mode = #tpu.pipeline_mode<synchronous>, transform_indices = @transform_5, window_bounds = array<i64: 128, 128>}, {pipeline_mode = #tpu.pipeline_mode<synchronous>, transform_indices = @transform_6, window_bounds = array<i64: 1, 128>}, {transform_indices = @transform_7, window_bounds = array<i64: 16, 128>}]} {
    %c0 = arith.constant 0 : index
    %c0_0 = arith.constant 0 : index
    %0 = vector.load %arg1[%c0, %c0_0] : memref<16x16xf32, #tpu.memory_space<vmem>>, vector<16x16xf32>
    %1 = arith.truncf %0 : vector<16x16xf32> to vector<16x16xbf16>
    %c0_1 = arith.constant 0 : index
    %c0_2 = arith.constant 0 : index
    %2 = vector.load %arg2[%c0_1, %c0_2] : memref<16x128xbf16, #tpu.memory_space<vmem>>, vector<16x128xbf16>
    %cst = arith.constant dense<0.000000e+00> : vector<16x128xf32>
    %3 = tpu.matmul %1, %2, %cst {dimension_numbers = #tpu.dot_dimension_numbers<[1], [0], [0], [1], [0, 0, 1, 1], [], []>} : vector<16x16xbf16>, vector<16x128xbf16>, vector<16x128xf32> -> vector<16x128xf32>
    %c0_3 = arith.constant 0 : index
    %c0_4 = arith.constant 0 : index
    %4 = vector.load %arg3[%c0_3, %c0_4] : memref<1x128xf32, #tpu.memory_space<vmem>>, vector<1x128xf32>
    %5 = vector.broadcast %4 : vector<1x128xf32> to vector<16x128xf32>
    %6 = arith.addf %3, %5 : vector<16x128xf32>
    %cst_5 = arith.constant 0.000000e+00 : f32
    %7 = vector.broadcast %cst_5 : f32 to vector<16x128xf32>
    %8 = arith.maximumf %6, %7 : vector<16x128xf32>
    %9 = arith.truncf %8 : vector<16x128xf32> to vector<16x128xbf16>
    %c0_6 = arith.constant 0 : index
    %c0_7 = arith.constant 0 : index
    %10 = vector.load %arg4[%c0_6, %c0_7] : memref<128x128xbf16, #tpu.memory_space<vmem>>, vector<128x128xbf16>
    %cst_8 = arith.constant dense<0.000000e+00> : vector<16x128xf32>
    %11 = tpu.matmul %9, %10, %cst_8 {dimension_numbers = #tpu.dot_dimension_numbers<[1], [0], [0], [1], [0, 0, 1, 1], [], []>} : vector<16x128xbf16>, vector<128x128xbf16>, vector<16x128xf32> -> vector<16x128xf32>
    %c0_9 = arith.constant 0 : index
    %c0_10 = arith.constant 0 : index
    %12 = vector.load %arg5[%c0_9, %c0_10] : memref<1x128xf32, #tpu.memory_space<vmem>>, vector<1x128xf32>
    %13 = vector.broadcast %12 : vector<1x128xf32> to vector<16x128xf32>
    %14 = arith.addf %11, %13 : vector<16x128xf32>
    %cst_11 = arith.constant 0.000000e+00 : f32
    %15 = vector.broadcast %cst_11 : f32 to vector<16x128xf32>
    %16 = arith.maximumf %14, %15 : vector<16x128xf32>
    %17 = arith.truncf %16 : vector<16x128xf32> to vector<16x128xbf16>
    %c0_12 = arith.constant 0 : index
    %c0_13 = arith.constant 0 : index
    %18 = vector.load %arg6[%c0_12, %c0_13] : memref<128x128xbf16, #tpu.memory_space<vmem>>, vector<128x128xbf16>
    %cst_14 = arith.constant dense<0.000000e+00> : vector<16x128xf32>
    %19 = tpu.matmul %17, %18, %cst_14 {dimension_numbers = #tpu.dot_dimension_numbers<[1], [0], [0], [1], [0, 0, 1, 1], [], []>} : vector<16x128xbf16>, vector<128x128xbf16>, vector<16x128xf32> -> vector<16x128xf32>
    %c0_15 = arith.constant 0 : index
    %c0_16 = arith.constant 0 : index
    %20 = vector.load %arg7[%c0_15, %c0_16] : memref<1x128xf32, #tpu.memory_space<vmem>>, vector<1x128xf32>
    %21 = vector.broadcast %20 : vector<1x128xf32> to vector<16x128xf32>
    %22 = arith.addf %19, %21 : vector<16x128xf32>
    %23 = arith.truncf %22 : vector<16x128xf32> to vector<16x128xbf16>
    %c0_17 = arith.constant 0 : index
    %c0_18 = arith.constant 0 : index
    %24 = vector.load %arg8[%c0_17, %c0_18] : memref<16x128xbf16, #tpu.memory_space<vmem>>, vector<16x128xbf16>
    tpu.vector_store %arg8[%c0_17, %c0_18], %23 {strides = array<i32>} : memref<16x128xbf16, #tpu.memory_space<vmem>>, vector<16x128xbf16>,
    return
  }
  func.func @transform_0(%arg0: i32) -> (i32, i32) {
    %c0_i32 = arith.constant 0 : i32
    %c0_i32_0 = arith.constant 0 : i32
    return %arg0, %c0_i32 : i32, i32
  }
  func.func @transform_1(%arg0: i32) -> (i32, i32) {
    %c0_i32 = arith.constant 0 : i32
    %c0_i32_0 = arith.constant 0 : i32
    %c0_i32_1 = arith.constant 0 : i32
    return %c0_i32, %c0_i32_0 : i32, i32
  }
  func.func @transform_2(%arg0: i32) -> (i32, i32) {
    %c0_i32 = arith.constant 0 : i32
    %c0_i32_0 = arith.constant 0 : i32
    %c0_i32_1 = arith.constant 0 : i32
    return %c0_i32, %c0_i32_0 : i32, i32
  }
  func.func @transform_3(%arg0: i32) -> (i32, i32) {
    %c0_i32 = arith.constant 0 : i32
    %c0_i32_0 = arith.constant 0 : i32
    %c0_i32_1 = arith.constant 0 : i32
    return %c0_i32, %c0_i32_0 : i32, i32
  }
  func.func @transform_4(%arg0: i32) -> (i32, i32) {
    %c0_i32 = arith.constant 0 : i32
    %c0_i32_0 = arith.constant 0 : i32
    %c0_i32_1 = arith.constant 0 : i32
    return %c0_i32, %c0_i32_0 : i32, i32
  }
  func.func @transform_5(%arg0: i32) -> (i32, i32) {
    %c0_i32 = arith.constant 0 : i32
    %c0_i32_0 = arith.constant 0 : i32
    %c0_i32_1 = arith.constant 0 : i32
    return %c0_i32, %c0_i32_0 : i32, i32
  }
  func.func @transform_6(%arg0: i32) -> (i32, i32) {
    %c0_i32 = arith.constant 0 : i32
    %c0_i32_0 = arith.constant 0 : i32
    %c0_i32_1 = arith.constant 0 : i32
    return %c0_i32, %c0_i32_0 : i32, i32
  }
  func.func @transform_7(%arg0: i32) -> (i32, i32) {
    %c0_i32 = arith.constant 0 : i32
    %c0_i32_0 = arith.constant 0 : i32
    return %arg0, %c0_i32 : i32, i32
  }
}

</mosaic_0001>

<llo_original>
// kernel: qnetwork_forward.1
$region0: #{qnetwork_forward.1}
  #allocation0 [shape = 'u32[]', space=smem, size = 0x4, offset = 0x4, fixed_abs, tag = 'smem constant byte address 0x4 - core index']
  #allocation1 [shape = 'u32[72,128]{1,0:T(1,128)}', space=vmem, size = 0x9000, scoped, tag = 'internal scratch']
  %s0 = inlined_call_operand.vmem [shape: f32[16,16], index: 0, kind: input, shape index: {}]
  %s1 = inlined_call_operand.vmem [shape: bf16[16,128], index: 1, kind: input, shape index: {}]
  %s2 = inlined_call_operand.vmem [shape: f32[1,128], index: 2, kind: input, shape index: {}]
  %s3 = inlined_call_operand.hbm [shape: bf16[128,128], index: 3, kind: input, shape index: {}]
  %s4 = inlined_call_operand.vmem [shape: f32[1,128], index: 4, kind: input, shape index: {}]
  %s5 = inlined_call_operand.hbm [shape: bf16[128,128], index: 5, kind: input, shape index: {}]
  %s6 = inlined_call_operand.vmem [shape: f32[1,128], index: 6, kind: input, shape index: {}]
  %s7 = inlined_call_operand.vmem [shape: bf16[16,128], index: 7, kind: output, shape index: {}]
  %s8 = sld [smem:[#allocation0]]
  $region46: #{qnetwork_forward.1} parent=0
    _
  %s10 = ssub.s32 1, %s8
  %s11 = scalar_select 0, %s10, %s8
  $region1: #{qnetwork_forward.1} parent=0
    #allocation2 [shape = 'u8[32768]{0}', space=vmem, size = 0x8000, scoped, tag = 'input window, operand 3, single buffered']
    #allocation3 [shape = 's32[1]{0}', space=sflag, size = 0x4, scoped, tag = 'scoped memory for qnetwork_forward.1']
    #allocation4 [shape = 'u8[32768]{0}', space=vmem, size = 0x8000, scoped, tag = 'input window, operand 5, single buffered']
    #allocation5 [shape = 's32[1]{0}', space=sflag, size = 0x4, scoped, tag = 'scoped memory for qnetwork_forward.1']
    %12 = vsyncpa [#allocation3], 0
    %13 = vsyncpa [#allocation5], 0
    // Predicated region
    $region2: #{qnetwork_forward.1} parent=1 // pred_check
      _
    $region3: #{qnetwork_forward.1} parent=1 // pred_check_branch
      %15 = sbr.rel (0) target = $region5
    $region4: #{qnetwork_forward.1} parent=1 // pred_region
      _
    $region5: #{qnetwork_forward.1} parent=1 // pred_fallthru
      _
    // Predicated region
    $region6: #{qnetwork_forward.1} parent=1 // pred_check
      _
    $region7: #{qnetwork_forward.1} parent=1 // pred_check_branch
      %17 = sbr.rel (0) target = $region9
    $region8: #{qnetwork_forward.1} parent=1 // pred_region
      _
    $region9: #{qnetwork_forward.1} parent=1 // pred_fallthru
      _
    // Predicated region
    $region10: #{qnetwork_forward.1} parent=1 // pred_check
      _
    $region11: #{qnetwork_forward.1} parent=1 // pred_check_branch
      %19 = sbr.rel (0) target = $region13
    $region12: #{qnetwork_forward.1} parent=1 // pred_region
      _
    $region13: #{qnetwork_forward.1} parent=1 // pred_fallthru
      _
    // Predicated region
    $region14: #{qnetwork_forward.1} parent=1 // pred_check
      _
    $region15: #{qnetwork_forward.1} parent=1 // pred_check_branch
      %21 = sbr.rel (0) target = $region17
    $region16: #{qnetwork_forward.1} parent=1 // pred_region
      %23 = vsyncadd [#allocation3], 0
      %s24 = sshll.u32 %s3, 4
      %s25 = int_to_ptr.hbm [resolvable:$true] %s24
      %s26 = sshll.u32 [#allocation2], 4
      %s27 = int_to_ptr.vmem [resolvable:$true] %s26
      %32 = dma.hbm_to_vmem [thread:$0]  %s25, 1024, %s27, [#allocation3], 64, 64, 4
    $region17: #{qnetwork_forward.1} parent=1 // pred_fallthru
      _
    // Predicated region
    $region18: #{qnetwork_forward.1} parent=1 // pred_check
      _
    $region19: #{qnetwork_forward.1} parent=1 // pred_check_branch
      %34 = sbr.rel (0) target = $region21
    $region20: #{qnetwork_forward.1} parent=1 // pred_region
      _
    $region21: #{qnetwork_forward.1} parent=1 // pred_fallthru
      _
    // Predicated region
    $region22: #{qnetwork_forward.1} parent=1 // pred_check
      _
    $region23: #{qnetwork_forward.1} parent=1 // pred_check_branch
      %36 = sbr.rel (0) target = $region25
    $region24: #{qnetwork_forward.1} parent=1 // pred_region
      %38 = vsyncadd [#allocation5], 0
      %s39 = sshll.u32 %s5, 4
      %s40 = int_to_ptr.hbm [resolvable:$true] %s39
      %s41 = sshll.u32 [#allocation4], 4
      %s42 = int_to_ptr.vmem [resolvable:$true] %s41
      %47 = dma.hbm_to_vmem [thread:$0]  %s40, 1024, %s42, [#allocation5], 64, 64, 4
    $region25: #{qnetwork_forward.1} parent=1 // pred_fallthru
      _
    // Predicated region
    $region26: #{qnetwork_forward.1} parent=1 // pred_check
      _
    $region27: #{qnetwork_forward.1} parent=1 // pred_check_branch
      %49 = sbr.rel (0) target = $region29
    $region28: #{qnetwork_forward.1} parent=1 // pred_region
      _
    $region29: #{qnetwork_forward.1} parent=1 // pred_fallthru
      _
    // Predicated region
    $region30: #{qnetwork_forward.1} parent=1 // pred_check
      _
    $region31: #{qnetwork_forward.1} parent=1 // pred_check_branch
      %51 = sbr.rel (0) target = $region33
    $region32: #{qnetwork_forward.1} parent=1 // pred_region
      %53 = dma.done [#allocation3], 1024
    $region33: #{qnetwork_forward.1} parent=1 // pred_fallthru
      _
    // Predicated region
    $region34: #{qnetwork_forward.1} parent=1 // pred_check
      _
    $region35: #{qnetwork_forward.1} parent=1 // pred_check_branch
      %55 = sbr.rel (0) target = $region37
    $region36: #{qnetwork_forward.1} parent=1 // pred_region
      %57 = dma.done [#allocation5], 1024
    $region37: #{qnetwork_forward.1} parent=1 // pred_fallthru
      _
    %v59 = vld [vmem:[%s0] sm:$0xff]
    %v60 = vld [vmem:[%s0 + $0x8] sm:$0xff]
    %v61 = vpack.c.bf16 %v60, %v59
    %v62 = vld [vmem:[%s1] sm:$0xf]
    %v63 = vld [vmem:[%s1 + $0x4] sm:$0xf]
    %v64 = vld [vmem:[%s2] sm:$0x1]
    %v66 = vperm.slane %v64, 0
    %v70 = vunpack.c.l.b16 %v62
    %v71 = vunpack.c.l.b16 %v63
    %v72 = vpack.c.b16 %v71, %v70
    %vm74 = vcmask 130048
    %v76 = vsel %vm74, %v61, 0
    %78 = vmatpush.bf16.msra.mxu0 0
    %79 = vmatpush.bf16.msra.mxu0 0
    %80 = vmatpush.bf16.msra.mxu0 0
    %81 = vmatpush.bf16.msra.mxu0 0
    %82 = vmatpush.bf16.msra.mxu0 0
    %83 = vmatpush.bf16.msra.mxu0 0
    %84 = vmatpush.bf16.msra.mxu0 0
    %85 = vmatpush.bf16.msra.mxu0 %v72
    %86 = vmatmul.bf16.gmra.mxu0 %v76
    %v87 = vpop.f32.mrf.mxu0
    %v88 = vadd.f32 %v66, %v87
    %v89 = vpop.f32.mrf.mxu0
    %v90 = vadd.f32 %v66, %v89
    %91 = vdwg.mxu0
    %v92 = vmax.f32 %v88, 0.0
    %v93 = vmax.f32 %v90, 0.0
    %v94 = vpack.c.bf16 %v93, %v92
    %v95 = vld [vmem:[#allocation2] sm:$0xf]
    %v96 = vld [vmem:[#allocation2 + $0x4] sm:$0xf]
    %v97 = vld [vmem:[#allocation2 + $0x8] sm:$0xf]
    %v98 = vld [vmem:[#allocation2 + $0xc] sm:$0xf]
    %v99 = vld [vmem:[#allocation2 + $0x10] sm:$0xf]
    %v100 = vld [vmem:[#allocation2 + $0x14] sm:$0xf]
    %v101 = vld [vmem:[#allocation2 + $0x18] sm:$0xf]
    %v102 = vld [vmem:[#allocation2 + $0x1c] sm:$0xf]
    %v103 = vld [vmem:[#allocation2 + $0x20] sm:$0xf]
    %v104 = vld [vmem:[#allocation2 + $0x24] sm:$0xf]
    %v105 = vld [vmem:[#allocation2 + $0x28] sm:$0xf]
    %v106 = vld [vmem:[#allocation2 + $0x2c] sm:$0xf]
    %v107 = vld [vmem:[#allocation2 + $0x30] sm:$0xf]
    %v108 = vld [vmem:[#allocation2 + $0x34] sm:$0xf]
    %v109 = vld [vmem:[#allocation2 + $0x38] sm:$0xf]
    %v110 = vld [vmem:[#allocation2 + $0x3c] sm:$0xf]
    %v111 = vld [vmem:[%s4] sm:$0x1]
    %v113 = vperm.slane %v111, 0
    %v131 = vunpack.c.l.b16 %v95
    %v132 = vunpack.c.l.b16 %v96
    %v133 = vunpack.c.l.b16 %v97
    %v134 = vunpack.c.l.b16 %v98
    %v135 = vunpack.c.l.b16 %v99
    %v136 = vunpack.c.l.b16 %v100
    %v137 = vunpack.c.l.b16 %v101
    %v138 = vunpack.c.l.b16 %v102
    %v139 = vunpack.c.l.b16 %v103
    %v140 = vunpack.c.l.b16 %v104
    %v141 = vunpack.c.l.b16 %v105
    %v142 = vunpack.c.l.b16 %v106
    %v143 = vunpack.c.l.b16 %v107
    %v144 = vunpack.c.l.b16 %v108
    %v145 = vunpack.c.l.b16 %v109
    %v146 = vunpack.c.l.b16 %v110
    %v147 = vpack.c.b16 %v132, %v131
    %v148 = vpack.c.b16 %v134, %v133
    %v149 = vpack.c.b16 %v136, %v135
    %v150 = vpack.c.b16 %v138, %v137
    %v151 = vpack.c.b16 %v140, %v139
    %v152 = vpack.c.b16 %v142, %v141
    %v153 = vpack.c.b16 %v144, %v143
    %v154 = vpack.c.b16 %v146, %v145
    %163 = vmatpush.bf16.msra.mxu0 %v154
    %164 = vmatpush.bf16.msra.mxu0 %v153
    %165 = vmatpush.bf16.msra.mxu0 %v152
    %166 = vmatpush.bf16.msra.mxu0 %v151
    %167 = vmatpush.bf16.msra.mxu0 %v150
    %168 = vmatpush.bf16.msra.mxu0 %v149
    %169 = vmatpush.bf16.msra.mxu0 %v148
    %170 = vmatpush.bf16.msra.mxu0 %v147
    %171 = vmatmul.bf16.gmra.mxu0 %v94
    %v172 = vpop.f32.mrf.mxu0
    %v173 = vadd.f32 %v113, %v172
    %v174 = vpop.f32.mrf.mxu0
    %v175 = vadd.f32 %v113, %v174
    %176 = vdwg.mxu0
    %v177 = vmax.f32 %v173, 0.0
    %v178 = vmax.f32 %v175, 0.0
    %v179 = vpack.c.bf16 %v178, %v177
    %v180 = vld [vmem:[#allocation4] sm:$0xf]
    %v181 = vld [vmem:[#allocation4 + $0x4] sm:$0xf]
    %v182 = vld [vmem:[#allocation4 + $0x8] sm:$0xf]
    %v183 = vld [vmem:[#allocation4 + $0xc] sm:$0xf]
    %v184 = vld [vmem:[#allocation4 + $0x10] sm:$0xf]
    %v185 = vld [vmem:[#allocation4 + $0x14] sm:$0xf]
    %v186 = vld [vmem:[#allocation4 + $0x18] sm:$0xf]
    %v187 = vld [vmem:[#allocation4 + $0x1c] sm:$0xf]
    %v188 = vld [vmem:[#allocation4 + $0x20] sm:$0xf]
    %v189 = vld [vmem:[#allocation4 + $0x24] sm:$0xf]
    %v190 = vld [vmem:[#allocation4 + $0x28] sm:$0xf]
    %v191 = vld [vmem:[#allocation4 + $0x2c] sm:$0xf]
    %v192 = vld [vmem:[#allocation4 + $0x30] sm:$0xf]
    %v193 = vld [vmem:[#allocation4 + $0x34] sm:$0xf]
    %v194 = vld [vmem:[#allocation4 + $0x38] sm:$0xf]
    %v195 = vld [vmem:[#allocation4 + $0x3c] sm:$0xf]
    %v196 = vld [vmem:[%s6] sm:$0x1]
    %v198 = vperm.slane %v196, 0
    %v216 = vunpack.c.l.b16 %v180
    %v217 = vunpack.c.l.b16 %v181
    %v218 = vunpack.c.l.b16 %v182
    %v219 = vunpack.c.l.b16 %v183
    %v220 = vunpack.c.l.b16 %v184
    %v221 = vunpack.c.l.b16 %v185
    %v222 = vunpack.c.l.b16 %v186
    %v223 = vunpack.c.l.b16 %v187
    %v224 = vunpack.c.l.b16 %v188
    %v225 = vunpack.c.l.b16 %v189
    %v226 = vunpack.c.l.b16 %v190
    %v227 = vunpack.c.l.b16 %v191
    %v228 = vunpack.c.l.b16 %v192
    %v229 = vunpack.c.l.b16 %v193
    %v230 = vunpack.c.l.b16 %v194
    %v231 = vunpack.c.l.b16 %v195
    %v232 = vpack.c.b16 %v217, %v216
    %v233 = vpack.c.b16 %v219, %v218
    %v234 = vpack.c.b16 %v221, %v220
    %v235 = vpack.c.b16 %v223, %v222
    %v236 = vpack.c.b16 %v225, %v224
    %v237 = vpack.c.b16 %v227, %v226
    %v238 = vpack.c.b16 %v229, %v228
    %v239 = vpack.c.b16 %v231, %v230
    %248 = vmatpush.bf16.msra.mxu0 %v239
    %249 = vmatpush.bf16.msra.mxu0 %v238
    %250 = vmatpush.bf16.msra.mxu0 %v237
    %251 = vmatpush.bf16.msra.mxu0 %v236
    %252 = vmatpush.bf16.msra.mxu0 %v235
    %253 = vmatpush.bf16.msra.mxu0 %v234
    %254 = vmatpush.bf16.msra.mxu0 %v233
    %255 = vmatpush.bf16.msra.mxu0 %v232
    %256 = vmatmul.bf16.gmra.mxu0 %v179
    %v257 = vpop.f32.mrf.mxu0
    %v258 = vadd.f32 %v198, %v257
    %v259 = vpop.f32.mrf.mxu0
    %v260 = vadd.f32 %v198, %v259
    %261 = vdwg.mxu0
    %v262 = vpack.c.bf16 %v258, %v258
    %v263 = vpack.c.bf16 %v260, %v260
    %264 = vst [vmem:[%s7] sm:$0xf] %v262
    %265 = vst [vmem:[%s7 + $0x4] sm:$0xf] %v263
    // Predicated region
    $region38: #{qnetwork_forward.1} parent=1 // pred_check
      _
    $region39: #{qnetwork_forward.1} parent=1 // pred_check_branch
      %267 = sbr.rel (0) target = $region41
    $region40: #{qnetwork_forward.1} parent=1 // pred_region
      _
    $region41: #{qnetwork_forward.1} parent=1 // pred_fallthru
      _
    // Predicated region
    $region42: #{qnetwork_forward.1} parent=1 // pred_check
      _
    $region43: #{qnetwork_forward.1} parent=1 // pred_check_branch
      %269 = sbr.rel (0) target = $region45
    $region44: #{qnetwork_forward.1} parent=1 // pred_region
      _
    $region45: #{qnetwork_forward.1} parent=1 // pred_fallthru
      _
    %270 = vsyncpa [#allocation3], 1
    %271 = vsyncpa [#allocation5], 1

</llo_original>
